<compile_context>
chip_gen: v7x
topology: tpu7x:2x2x1
jax: 0.10.0
libtpu: 0.0.40
codegen_flags: <defaults>
</compile_context>

<pallas_src>
import functools

import jax
import jax.numpy as jnp
from jax import lax
from jax.experimental import pallas as pl
from jax.experimental.pallas import tpu as pltpu


ERROR_UPDATE_RATE = 0.05  # matches ALLOLoss default


def _allo_partials_kernel(start_ref, end_ref, c1_ref, c2_ref,
                          gn_ref, gram_ref):
    """Streams lane-dense (tr, 128) tiles and accumulates two partial sums.

    gn_ref   (1, 128):   running sum over rows of (start - end)^2 per column
    gram_ref (128, 128): running sum of X1^T X1 + X2^T X2 on the dense view
    Both output block indices depend only on the leading (core-split) grid
    axis, so they stay VMEM-resident across the inner "arbitrary" axis.
    """
    @pl.when(pl.program_id(1) == 0)
    def _init():
        gn_ref[...] = jnp.zeros_like(gn_ref)
        gram_ref[...] = jnp.zeros_like(gram_ref)

    diff = start_ref[...] - end_ref[...]
    gn_ref[...] += jnp.sum(diff * diff, axis=0, keepdims=True)

    c1 = c1_ref[...]
    c2 = c2_ref[...]
    # Contract the row (batch/sublane) axis of both operands: X^T X on the
    # MXU with no explicit transpose of the streamed operands.
    dn = (((0,), (0,)), ((), ()))
    gram_ref[...] += (
        lax.dot_general(c1, c1, dimension_numbers=dn,
                        preferred_element_type=jnp.float32)
        + lax.dot_general(c2, c2, dimension_numbers=dn,
                          preferred_element_type=jnp.float32))


@functools.partial(jax.jit, static_argnames=("block_n",))
def allo_loss_forward(start, end, c1, c2, duals, coeff, err_est, quad_est,
                      barrier_coef, *, block_n=32768):
    """ALLOLoss.forward.

    Returns (total_loss, new_error_estimates, new_quadratic_error_estimates).
    The EMA state update is functional (no input donation).
    """
    n, d = start.shape
    if 128 % d != 0:
        raise NotImplementedError("lane-dense layout requires 128 % d == 0")
    pack = 128 // d          # original rows folded into one 128-lane row
    lanes = pack * d         # == 128
    row_align = 8 * pack     # original rows per (8, 128) vreg tile

    # Tile size in original rows.  The default (32768) keeps the 4-stream
    # double-buffered footprint ~8 MiB (< v5e's 16 MiB default scoped VMEM);
    # raise block_n together with CompilerParams(vmem_limit_bytes=...) on
    # v6e/v7x if desired.
    tn = min(block_n, pl.cdiv(n, row_align) * row_align)
    tn = max(row_align, (tn // row_align) * row_align)

    total_tiles = pl.cdiv(n, tn)
    # Leading "parallel" axis: on v7x each TensorCore reduces half the tiles
    # into its own partial-output slice; on 1-TC chips it is just a second
    # (cheap) sequential outer iteration.
    num_splits = 2 if total_tiles >= 2 else 1
    tiles_per_split = pl.cdiv(total_tiles, num_splits)
    n_pad = num_splits * tiles_per_split * tn

    def _prep(x):
        x = x.astype(jnp.float32)
        if n_pad != n:
            # Zero rows contribute nothing to either partial sum; the true n
            # is used for all 1/n scaling below.
            x = jnp.pad(x, ((0, n_pad - n), (0, 0)))
        return x.reshape(n_pad // pack, lanes)   # lane-dense, zero-cost view

    streams = [_prep(x) for x in (start, end, c1, c2)]
    tr = tn // pack   # reshaped rows per streamed block (multiple of 8)

    stream_spec = pl.BlockSpec(
        (tr, lanes), lambda c, i, T=tiles_per_split: (c * T + i, 0))

    grid_spec = pltpu.PrefetchScalarGridSpec(
        num_scalar_prefetch=0,
        grid=(num_splits, tiles_per_split),
        in_specs=[stream_spec] * 4,
        out_specs=(
            pl.BlockSpec((None, 1, lanes), lambda c, i: (c, 0, 0)),
            pl.BlockSpec((None, lanes, lanes), lambda c, i: (c, 0, 0)),
        ),
    )

    gn_part, gram_part = pl.pallas_call(
        _allo_partials_kernel,
        out_shape=(
            jax.ShapeDtypeStruct((num_splits, 1, lanes), jnp.float32),
            jax.ShapeDtypeStruct((num_splits, lanes, lanes), jnp.float32),
        ),
        grid_spec=grid_spec,
        compiler_params=pltpu.CompilerParams(
            dimension_semantics=("parallel", "arbitrary")),
    )(*streams)

    # ---- tiny d x d epilogue in plain JAX (fused into the same jit) --------
    inv_n = 1.0 / n
    gn128 = jnp.sum(gn_part, axis=(0, 1))                       # (128,)
    graph_norms = jnp.sum(gn128.reshape(pack, d), axis=0) * inv_n
    graph_loss = jnp.dot(graph_norms, coeff.reshape(-1))

    g128 = jnp.sum(gram_part, axis=0)                           # (128, 128)
    jdx = jnp.arange(pack)
    # Gram[f, g] = sum_j g128[j*d + f, j*d + g]  (diagonal d x d blocks).
    gram = jnp.sum(g128.reshape(pack, d, pack, d)[jdx, :, jdx, :], axis=0)

    eye = jnp.eye(d, dtype=jnp.float32)
    # tril(0.5*(ip1 - I)) + tril(0.5*(ip2 - I)) == tril(0.5*(ip1+ip2) - I)
    error_matrix = jnp.tril(0.5 * inv_n * gram - eye)
    quadratic_error_matrix = error_matrix * error_matrix

    dual_loss = jnp.sum(duals * error_matrix)
    barrier_loss = barrier_coef.reshape(()) * jnp.sum(quadratic_error_matrix)
    total_loss = graph_loss + dual_loss + barrier_loss

    r = ERROR_UPDATE_RATE
    new_err = (1.0 - r) * err_est + r * error_matrix
    new_quad = (1.0 - r) * quad_est + r * quadratic_error_matrix

    return total_loss, new_err, new_quad


def allo_loss_reference(start, end, c1, c2, duals, coeff, err_est, quad_est,
                        barrier_coef):
    """Pure-JAX reference mirroring the PyTorch forward."""
    n, d = start.shape
    graph_norms = jnp.mean((start - end) ** 2, axis=0)
    graph_loss = jnp.dot(graph_norms, coeff.reshape(-1))
    ip1 = (c1.T @ c1) / n
    ip2 = (c2.T @ c2) / n
    eye = jnp.eye(d, dtype=jnp.float32)
    err = 0.5 * (jnp.tril(ip1 - eye) + jnp.tril(ip2 - eye))
    quad = err ** 2
    dual_loss = jnp.sum(duals * err)
    barrier_loss = barrier_coef.reshape(()) * jnp.sum(quad)
    r = ERROR_UPDATE_RATE
    new_err = (1 - r) * err_est + r * err
    new_quad = (1 - r) * quad_est + r * quad
    return graph_loss + dual_loss + barrier_loss, new_err, new_quad


def _run_case(key, n, d, block_n):
    ks = jax.random.split(key, 5)
    start = jax.random.normal(ks[0], (n, d), dtype=jnp.float32)
    end = jax.random.normal(ks[1], (n, d), dtype=jnp.float32)
    c1 = jax.random.normal(ks[2], (n, d), dtype=jnp.float32)
    c2 = jax.random.normal(ks[3], (n, d), dtype=jnp.float32)
    duals = 0.1 * jax.random.normal(ks[4], (d, d), dtype=jnp.float32)

    coeff = jnp.ones((1, d), dtype=jnp.float32)          # coefficient_vector
    err_est = jnp.zeros((d, d), dtype=jnp.float32)       # error_estimates
    quad_est = jnp.zeros((d, d), dtype=jnp.float32)      # quadratic estimates
    barrier = jnp.full((1, 1), 2.0, dtype=jnp.float32)   # barrier_initial_val

    out = allo_loss_forward(start, end, c1, c2, duals, coeff, err_est,
                            quad_est, barrier, block_n=block_n)
    jax.block_until_ready(out)
    loss, new_err, new_quad = out

    ref_loss, ref_err, ref_quad = allo_loss_reference(
        start, end, c1, c2, duals, coeff, err_est, quad_est, barrier)

    assert jnp.allclose(loss, ref_loss, rtol=1e-5, atol=2e-5), (loss, ref_loss)
    assert jnp.allclose(new_err, ref_err, rtol=1e-5, atol=2e-5)
    assert jnp.allclose(new_quad, ref_quad, rtol=1e-5, atol=2e-5)


if __name__ == "__main__":
    d = 8  # representation dimension (ALLOLoss.d)

    # two-way core split, exact tiling (two 256-row tiles)
    _run_case(jax.random.PRNGKey(0), n=512, d=d, block_n=256)
    # ragged batch (zero-pad path) with two 128-row tiles
    _run_case(jax.random.PRNGKey(1), n=200, d=d, block_n=128)
    # single tile: small batch with the large default tile clamped to n
    _run_case(jax.random.PRNGKey(2), n=96, d=d, block_n=32768)

    print("KERNEL_OK")
</pallas_src>

<mosaic_0001>
module attributes {stable_mosaic.version = 11 : i64} {
  func.func @_allo_partials_kernel(%arg0: i32, %arg1: i32, %arg2: memref<16x128xf32, #tpu.memory_space<vmem>>, %arg3: memref<16x128xf32, #tpu.memory_space<vmem>>, %arg4: memref<16x128xf32, #tpu.memory_space<vmem>>, %arg5: memref<16x128xf32, #tpu.memory_space<vmem>>, %arg6: memref<1x1x128xf32, #tpu.memory_space<vmem>>, %arg7: memref<1x128x128xf32, #tpu.memory_space<vmem>>) attributes {dimension_semantics = [#tpu.dimension_semantics<parallel>, #tpu.dimension_semantics<arbitrary>], iteration_bounds = array<i64: 2, 1>, scalar_prefetch = 0 : i64, scratch_operands = 0 : i64, tpu.core_type = #tpu.core_type<tc>, window_params = [{transform_indices = @transform_0, window_bounds = array<i64: 16, 128>}, {transform_indices = @transform_1, window_bounds = array<i64: 16, 128>}, {transform_indices = @transform_2, window_bounds = array<i64: 16, 128>}, {transform_indices = @transform_3, window_bounds = array<i64: 16, 128>}, {transform_indices = @transform_4, window_bounds = array<i64: 1, 1, 128>}, {transform_indices = @transform_5, window_bounds = array<i64: 1, 128, 128>}]} {
    %c0_i32 = arith.constant 0 : i32
    %0 = arith.cmpi eq, %arg1, %c0_i32 : i32
    %1 = arith.extui %0 : i1 to i32
    %c0_i32_0 = arith.constant 0 : i32
    %2 = arith.cmpi ne, %1, %c0_i32_0 : i32
    scf.if %2 {
      %cst_22 = arith.constant 0.000000e+00 : f32
      %26 = vector.broadcast %cst_22 : f32 to vector<1x128xf32>
      %c0_23 = arith.constant 0 : index
      %c0_24 = arith.constant 0 : index
      %c0_25 = arith.constant 0 : index
      %27 = vector.load %arg6[%c0_23, %c0_24, %c0_25] : memref<1x1x128xf32, #tpu.memory_space<vmem>>, vector<1x1x128xf32>
      %28 = vector.shape_cast %27 : vector<1x1x128xf32> to vector<1x128xf32>
      %29 = vector.shape_cast %26 : vector<1x128xf32> to vector<1x1x128xf32>
      tpu.vector_store %arg6[%c0_23, %c0_24, %c0_25], %29 {strides = array<i32>} : memref<1x1x128xf32, #tpu.memory_space<vmem>>, vector<1x1x128xf32>,
      %cst_26 = arith.constant 0.000000e+00 : f32
      %30 = vector.broadcast %cst_26 : f32 to vector<128x128xf32>
      %c0_27 = arith.constant 0 : index
      %c0_28 = arith.constant 0 : index
      %c0_29 = arith.constant 0 : index
      %31 = vector.load %arg7[%c0_27, %c0_28, %c0_29] : memref<1x128x128xf32, #tpu.memory_space<vmem>>, vector<1x128x128xf32>
      %32 = vector.shape_cast %31 : vector<1x128x128xf32> to vector<128x128xf32>
      %33 = vector.shape_cast %30 : vector<128x128xf32> to vector<1x128x128xf32>
      tpu.vector_store %arg7[%c0_27, %c0_28, %c0_29], %33 {strides = array<i32>} : memref<1x128x128xf32, #tpu.memory_space<vmem>>, vector<1x128x128xf32>,
    } else {
    }
    %c0 = arith.constant 0 : index
    %c0_1 = arith.constant 0 : index
    %3 = vector.load %arg2[%c0, %c0_1] : memref<16x128xf32, #tpu.memory_space<vmem>>, vector<16x128xf32>
    %c0_2 = arith.constant 0 : index
    %c0_3 = arith.constant 0 : index
    %4 = vector.load %arg3[%c0_2, %c0_3] : memref<16x128xf32, #tpu.memory_space<vmem>>, vector<16x128xf32>
    %5 = arith.subf %3, %4 : vector<16x128xf32>
    %c0_4 = arith.constant 0 : index
    %c0_5 = arith.constant 0 : index
    %c0_6 = arith.constant 0 : index
    %6 = vector.load %arg6[%c0_4, %c0_5, %c0_6] : memref<1x1x128xf32, #tpu.memory_space<vmem>>, vector<1x1x128xf32>
    %7 = vector.shape_cast %6 : vector<1x1x128xf32> to vector<1x128xf32>
    %8 = arith.mulf %5, %5 : vector<16x128xf32>
    %cst = arith.constant dense<0.000000e+00> : vector<128xf32>
    %9 = vector.multi_reduction <add>, %8, %cst [0] : vector<16x128xf32> to vector<128xf32>
    %10 = vector.shape_cast %9 : vector<128xf32> to vector<1x128xf32>
    %11 = arith.addf %7, %10 : vector<1x128xf32>
    %c0_7 = arith.constant 0 : index
    %c0_8 = arith.constant 0 : index
    %c0_9 = arith.constant 0 : index
    %12 = vector.load %arg6[%c0_7, %c0_8, %c0_9] : memref<1x1x128xf32, #tpu.memory_space<vmem>>, vector<1x1x128xf32>
    %13 = vector.shape_cast %12 : vector<1x1x128xf32> to vector<1x128xf32>
    %14 = vector.shape_cast %11 : vector<1x128xf32> to vector<1x1x128xf32>
    tpu.vector_store %arg6[%c0_7, %c0_8, %c0_9], %14 {strides = array<i32>} : memref<1x1x128xf32, #tpu.memory_space<vmem>>, vector<1x1x128xf32>,
    %c0_10 = arith.constant 0 : index
    %c0_11 = arith.constant 0 : index
    %15 = vector.load %arg4[%c0_10, %c0_11] : memref<16x128xf32, #tpu.memory_space<vmem>>, vector<16x128xf32>
    %c0_12 = arith.constant 0 : index
    %c0_13 = arith.constant 0 : index
    %16 = vector.load %arg5[%c0_12, %c0_13] : memref<16x128xf32, #tpu.memory_space<vmem>>, vector<16x128xf32>
    %c0_14 = arith.constant 0 : index
    %c0_15 = arith.constant 0 : index
    %c0_16 = arith.constant 0 : index
    %17 = vector.load %arg7[%c0_14, %c0_15, %c0_16] : memref<1x128x128xf32, #tpu.memory_space<vmem>>, vector<1x128x128xf32>
    %18 = vector.shape_cast %17 : vector<1x128x128xf32> to vector<128x128xf32>
    %cst_17 = arith.constant dense<0.000000e+00> : vector<128x128xf32>
    %19 = tpu.matmul %15, %15, %cst_17 {dimension_numbers = #tpu.dot_dimension_numbers<[0], [0], [1], [1], [0, 1, 1, 1], [], []>} : vector<16x128xf32>, vector<16x128xf32>, vector<128x128xf32> -> vector<128x128xf32>
    %cst_18 = arith.constant dense<0.000000e+00> : vector<128x128xf32>
    %20 = tpu.matmul %16, %16, %cst_18 {dimension_numbers = #tpu.dot_dimension_numbers<[0], [0], [1], [1], [0, 1, 1, 1], [], []>} : vector<16x128xf32>, vector<16x128xf32>, vector<128x128xf32> -> vector<128x128xf32>
    %21 = arith.addf %19, %20 : vector<128x128xf32>
    %22 = arith.addf %18, %21 : vector<128x128xf32>
    %c0_19 = arith.constant 0 : index
    %c0_20 = arith.constant 0 : index
    %c0_21 = arith.constant 0 : index
    %23 = vector.load %arg7[%c0_19, %c0_20, %c0_21] : memref<1x128x128xf32, #tpu.memory_space<vmem>>, vector<1x128x128xf32>
    %24 = vector.shape_cast %23 : vector<1x128x128xf32> to vector<128x128xf32>
    %25 = vector.shape_cast %22 : vector<128x128xf32> to vector<1x128x128xf32>
    tpu.vector_store %arg7[%c0_19, %c0_20, %c0_21], %25 {strides = array<i32>} : memref<1x128x128xf32, #tpu.memory_space<vmem>>, vector<1x128x128xf32>,
    return
  }
  func.func @transform_0(%arg0: i32, %arg1: i32) -> (i32, i32) {
    %c1_i32 = arith.constant 1 : i32
    %0 = arith.muli %arg0, %c1_i32 : i32
    %1 = arith.addi %0, %arg1 : i32
    %c0_i32 = arith.constant 0 : i32
    %c0_i32_0 = arith.constant 0 : i32
    return %1, %c0_i32 : i32, i32
  }
  func.func @transform_1(%arg0: i32, %arg1: i32) -> (i32, i32) {
    %c1_i32 = arith.constant 1 : i32
    %0 = arith.muli %arg0, %c1_i32 : i32
    %1 = arith.addi %0, %arg1 : i32
    %c0_i32 = arith.constant 0 : i32
    %c0_i32_0 = arith.constant 0 : i32
    return %1, %c0_i32 : i32, i32
  }
  func.func @transform_2(%arg0: i32, %arg1: i32) -> (i32, i32) {
    %c1_i32 = arith.constant 1 : i32
    %0 = arith.muli %arg0, %c1_i32 : i32
    %1 = arith.addi %0, %arg1 : i32
    %c0_i32 = arith.constant 0 : i32
    %c0_i32_0 = arith.constant 0 : i32
    return %1, %c0_i32 : i32, i32
  }
  func.func @transform_3(%arg0: i32, %arg1: i32) -> (i32, i32) {
    %c1_i32 = arith.constant 1 : i32
    %0 = arith.muli %arg0, %c1_i32 : i32
    %1 = arith.addi %0, %arg1 : i32
    %c0_i32 = arith.constant 0 : i32
    %c0_i32_0 = arith.constant 0 : i32
    return %1, %c0_i32 : i32, i32
  }
  func.func @transform_4(%arg0: i32, %arg1: i32) -> (i32, i32, i32) {
    %c0_i32 = arith.constant 0 : i32
    %c0_i32_0 = arith.constant 0 : i32
    %c0_i32_1 = arith.constant 0 : i32
    return %arg0, %c0_i32, %c0_i32_0 : i32, i32, i32
  }
  func.func @transform_5(%arg0: i32, %arg1: i32) -> (i32, i32, i32) {
    %c0_i32 = arith.constant 0 : i32
    %c0_i32_0 = arith.constant 0 : i32
    %c0_i32_1 = arith.constant 0 : i32
    return %arg0, %c0_i32, %c0_i32_0 : i32, i32, i32
  }
}

</mosaic_0001>

<llo_original>
// kernel: allo_loss_forward.1
$region0: #{allo_loss_forward.1}
  #allocation0 [shape = 'u32[]', space=smem, size = 0x4, offset = 0x4, fixed_abs, tag = 'smem constant byte address 0x4 - core index']
  #allocation1 [shape = 'u32[144,128]{1,0:T(1,128)}', space=vmem, size = 0x12000, scoped, tag = 'internal scratch']
  %s0 = inlined_call_operand.vmem [shape: f32[32,128], index: 0, kind: input, shape index: {}]
  %s1 = inlined_call_operand.vmem [shape: f32[32,128], index: 1, kind: input, shape index: {}]
  %s2 = inlined_call_operand.vmem [shape: f32[32,128], index: 2, kind: input, shape index: {}]
  %s3 = inlined_call_operand.vmem [shape: f32[32,128], index: 3, kind: input, shape index: {}]
  %s4 = inlined_call_operand.vmem [shape: f32[2,1,128], index: 4, kind: output, shape index: {0}]
  %s5 = inlined_call_operand.vmem [shape: f32[2,128,128], index: 5, kind: output, shape index: {1}]
  %6 = xla_tuple %s4, %s5
  %s7 = sld [smem:[#allocation0]]
  $region61: #{allo_loss_forward.1} parent=0
    _
  %s9 = ssub.s32 1, %s7
  %s10 = scalar_select 0, %s9, %s7
  loop: start=0, step=1, limit=4
  $region2: #{allo_loss_forward.1} parent=0 // loop_pre_header
    _
  $region3: #{allo_loss_forward.1} parent=0 // loop_header
    %s12 = sphi 0, %s16
    %p13 = scmp.ge.s32.totalorder %s12, 4
    %s19 = sphi 0, %s31
    %s20 = sphi 0, %s27
    %s21 = sphi 0, %s19
    %s22 = sphi 0, %s20
    %s23 = sphi 0, %s21
    %s24 = sphi 0, %s22
    %s36 = sphi 0, %s38
    %s39 = sphi 0, %s36
    %s40 = sphi 0, %s39
    %s56 = sphi 0, %s40
    %s64 = sphi 0, %s66
    %s67 = sphi 0, %s64
    %s68 = sphi 0, %s67
    %s84 = sphi 0, %s68
    %s92 = sphi 0, %s94
    %s95 = sphi 0, %s92
    %s96 = sphi 0, %s95
    %s112 = sphi 0, %s96
    %s120 = sphi 0, %s122
    %s123 = sphi 0, %s120
    %s124 = sphi 0, %s123
    %s140 = sphi 0, %s124
    %s146 = sphi 0, %s148
    %s149 = sphi 0, %s146
    %s150 = sphi 0, %s149
    %s166 = sphi 0, %s150
    %s172 = sphi 0, %s174
    %s175 = sphi 0, %s172
    %s176 = sphi 0, %s175
    %s192 = sphi 0, %s176
  $region4: #{allo_loss_forward.1} parent=0 // loop_header_branch
    %15 = sbr.rel (%p13) target = $region8
  $region5: #{allo_loss_forward.1} parent=0 // loop_body
    %s17 = ssub.s32 %s12, 1
    %s18 = ssub.s32 %s12, 2
    %s25 = sadd.s32 1, %s20
    %p26 = scmp.ge.s32.totalorder %s25, 1
    %s27 = scalar_select %p26, 0, %s25
    %s28 = sadd.s32 1, %s19
    %s29 = scalar_select %p26, %s28, %s19
    %p30 = scmp.ge.s32.totalorder %s29, 2
    %s31 = scalar_select %p30, 0, %s29
    %s32 = sadd.s32 %s19, %s20
    %s33 = sadd.s32 %s31, %s27
    %s34 = ssub.s32 %s32, %s33
    %p35 = scmp.eq.s32.totalorder %s34, 0
    %s37 = sadd.s32 %s36, 1
    %s38 = scalar_select %p35, %s36, %s37
    %p41 = pneg %p35
    %p42 = scmp.eq.s32.totalorder %s12, 1
    %p43 = por %p41, %p42
    %p44 = scmp.ne.s32.totalorder %s36, %s39
    %p45 = scmp.eq.s32.totalorder %s12, 0
    %p46 = por %p44, %p45
    %p47 = scmp.ne.s32.totalorder %s36, %s39
    %p48 = scmp.eq.s32.totalorder %s17, 1
    %p49 = por %p47, %p48
    %p50 = scmp.ne.s32.totalorder %s39, %s40
    %p51 = scmp.eq.s32.totalorder %s17, 0
    %p52 = por %p50, %p51
    %p53 = scmp.ne.s32.totalorder %s39, %s40
    %p54 = scmp.eq.s32.totalorder %s18, 1
    %p55 = por %p53, %p54
    %p57 = scmp.ne.s32.totalorder %s40, %s56
    %p58 = scmp.eq.s32.totalorder %s18, 0
    %p59 = por %p57, %p58
    %s60 = sadd.s32 %s19, %s20
    %s61 = sadd.s32 %s31, %s27
    %s62 = ssub.s32 %s60, %s61
    %p63 = scmp.eq.s32.totalorder %s62, 0
    %s65 = sadd.s32 %s64, 1
    %s66 = scalar_select %p63, %s64, %s65
    %p69 = pneg %p63
    %p70 = scmp.eq.s32.totalorder %s12, 1
    %p71 = por %p69, %p70
    %p72 = scmp.ne.s32.totalorder %s64, %s67
    %p73 = scmp.eq.s32.totalorder %s12, 0
    %p74 = por %p72, %p73
    %p75 = scmp.ne.s32.totalorder %s64, %s67
    %p76 = scmp.eq.s32.totalorder %s17, 1
    %p77 = por %p75, %p76
    %p78 = scmp.ne.s32.totalorder %s67, %s68
    %p79 = scmp.eq.s32.totalorder %s17, 0
    %p80 = por %p78, %p79
    %p81 = scmp.ne.s32.totalorder %s67, %s68
    %p82 = scmp.eq.s32.totalorder %s18, 1
    %p83 = por %p81, %p82
    %p85 = scmp.ne.s32.totalorder %s68, %s84
    %p86 = scmp.eq.s32.totalorder %s18, 0
    %p87 = por %p85, %p86
    %s88 = sadd.s32 %s19, %s20
    %s89 = sadd.s32 %s31, %s27
    %s90 = ssub.s32 %s88, %s89
    %p91 = scmp.eq.s32.totalorder %s90, 0
    %s93 = sadd.s32 %s92, 1
    %s94 = scalar_select %p91, %s92, %s93
    %p97 = pneg %p91
    %p98 = scmp.eq.s32.totalorder %s12, 1
    %p99 = por %p97, %p98
    %p100 = scmp.ne.s32.totalorder %s92, %s95
    %p101 = scmp.eq.s32.totalorder %s12, 0
    %p102 = por %p100, %p101
    %p103 = scmp.ne.s32.totalorder %s92, %s95
    %p104 = scmp.eq.s32.totalorder %s17, 1
    %p105 = por %p103, %p104
    %p106 = scmp.ne.s32.totalorder %s95, %s96
    %p107 = scmp.eq.s32.totalorder %s17, 0
    %p108 = por %p106, %p107
    %p109 = scmp.ne.s32.totalorder %s95, %s96
    %p110 = scmp.eq.s32.totalorder %s18, 1
    %p111 = por %p109, %p110
    %p113 = scmp.ne.s32.totalorder %s96, %s112
    %p114 = scmp.eq.s32.totalorder %s18, 0
    %p115 = por %p113, %p114
    %s116 = sadd.s32 %s19, %s20
    %s117 = sadd.s32 %s31, %s27
    %s118 = ssub.s32 %s116, %s117
    %p119 = scmp.eq.s32.totalorder %s118, 0
    %s121 = sadd.s32 %s120, 1
    %s122 = scalar_select %p119, %s120, %s121
    %p125 = pneg %p119
    %p126 = scmp.eq.s32.totalorder %s12, 1
    %p127 = por %p125, %p126
    %p128 = scmp.ne.s32.totalorder %s120, %s123
    %p129 = scmp.eq.s32.totalorder %s12, 0
    %p130 = por %p128, %p129
    %p131 = scmp.ne.s32.totalorder %s120, %s123
    %p132 = scmp.eq.s32.totalorder %s17, 1
    %p133 = por %p131, %p132
    %p134 = scmp.ne.s32.totalorder %s123, %s124
    %p135 = scmp.eq.s32.totalorder %s17, 0
    %p136 = por %p134, %p135
    %p137 = scmp.ne.s32.totalorder %s123, %s124
    %p138 = scmp.eq.s32.totalorder %s18, 1
    %p139 = por %p137, %p138
    %p141 = scmp.ne.s32.totalorder %s124, %s140
    %p142 = scmp.eq.s32.totalorder %s18, 0
    %p143 = por %p141, %p142
    %s144 = ssub.s32 %s19, %s31
    %p145 = scmp.eq.s32.totalorder %s144, 0
    %s147 = sadd.s32 %s146, 1
    %s148 = scalar_select %p145, %s146, %s147
    %p151 = pneg %p145
    %p152 = scmp.eq.s32.totalorder %s12, 1
    %p153 = por %p151, %p152
    %p154 = scmp.ne.s32.totalorder %s146, %s149
    %p155 = scmp.eq.s32.totalorder %s12, 0
    %p156 = por %p154, %p155
    %p157 = scmp.ne.s32.totalorder %s146, %s149
    %p158 = scmp.eq.s32.totalorder %s17, 1
    %p159 = por %p157, %p158
    %p160 = scmp.ne.s32.totalorder %s149, %s150
    %p161 = scmp.eq.s32.totalorder %s17, 0
    %p162 = por %p160, %p161
    %p163 = scmp.ne.s32.totalorder %s149, %s150
    %p164 = scmp.eq.s32.totalorder %s18, 1
    %p165 = por %p163, %p164
    %p167 = scmp.ne.s32.totalorder %s150, %s166
    %p168 = scmp.eq.s32.totalorder %s18, 0
    %p169 = por %p167, %p168
    %s170 = ssub.s32 %s19, %s31
    %p171 = scmp.eq.s32.totalorder %s170, 0
    %s173 = sadd.s32 %s172, 1
    %s174 = scalar_select %p171, %s172, %s173
    %p177 = pneg %p171
    %p178 = scmp.eq.s32.totalorder %s12, 1
    %p179 = por %p177, %p178
    %p180 = scmp.ne.s32.totalorder %s172, %s175
    %p181 = scmp.eq.s32.totalorder %s12, 0
    %p182 = por %p180, %p181
    %p183 = scmp.ne.s32.totalorder %s172, %s175
    %p184 = scmp.eq.s32.totalorder %s17, 1
    %p185 = por %p183, %p184
    %p186 = scmp.ne.s32.totalorder %s175, %s176
    %p187 = scmp.eq.s32.totalorder %s17, 0
    %p188 = por %p186, %p187
    %p189 = scmp.ne.s32.totalorder %s175, %s176
    %p190 = scmp.eq.s32.totalorder %s18, 1
    %p191 = por %p189, %p190
    %p193 = scmp.ne.s32.totalorder %s176, %s192
    %p194 = scmp.eq.s32.totalorder %s18, 0
    %p195 = por %p193, %p194
    %p196 = scmp.le.s32.totalorder 1, %s12
    %p197 = scmp.lt.s32.totalorder %s12, 3
    %p198 = pnand %p196, %p197
    %p199 = pneg %p198
    // Predicated region
    $region9: #{allo_loss_forward.1} parent=5 // pred_check
      _
    $region10: #{allo_loss_forward.1} parent=5 // pred_check_branch
      %201 = sbr.rel (%p198) target = $region12
    $region11: #{allo_loss_forward.1} parent=5 // pred_region
      %s202 = ssub.s32 %s12, 1
    $region12: #{allo_loss_forward.1} parent=5 // pred_fallthru
      _
    %p203 = scmp.lt.s32.totalorder %s12, 2
    // Predicated region
    $region13: #{allo_loss_forward.1} parent=5 // pred_check
      %p204 = pneg %p203
    $region14: #{allo_loss_forward.1} parent=5 // pred_check_branch
      %206 = sbr.rel (%p204) target = $region16
    $region15: #{allo_loss_forward.1} parent=5 // pred_region
      // Predicated region
      $region17: #{allo_loss_forward.1} parent=15 // pred_check
        %p207 = pneg %p46
      $region18: #{allo_loss_forward.1} parent=15 // pred_check_branch
        %209 = sbr.rel (%p207) target = $region20
      $region19: #{allo_loss_forward.1} parent=15 // pred_region
        %s210 = sadd.s32 %s19, %s20
        %s211 = smul.u32 2, %s210
        %p212 = scmp.lt.s32.totalorder %s211, 3
        %s213 = scalar_select %p212, %s211, 3
        %s214 = smul.addr %s213, 8
        %s215 = scalar_lea.vmem %s0, %s214
        %s216 = sadd.s32 %s19, %s20
        %s217 = smul.u32 2, %s216
      $region20: #{allo_loss_forward.1} parent=15 // pred_fallthru
        _
      // Predicated region
      $region21: #{allo_loss_forward.1} parent=15 // pred_check
        %p218 = pneg %p74
      $region22: #{allo_loss_forward.1} parent=15 // pred_check_branch
        %220 = sbr.rel (%p218) target = $region24
      $region23: #{allo_loss_forward.1} parent=15 // pred_region
        %s221 = sadd.s32 %s19, %s20
        %s222 = smul.u32 2, %s221
        %p223 = scmp.lt.s32.totalorder %s222, 3
        %s224 = scalar_select %p223, %s222, 3
        %s225 = smul.addr %s224, 8
        %s226 = scalar_lea.vmem %s1, %s225
        %s227 = sadd.s32 %s19, %s20
        %s228 = smul.u32 2, %s227
      $region24: #{allo_loss_forward.1} parent=15 // pred_fallthru
        _
      // Predicated region
      $region25: #{allo_loss_forward.1} parent=15 // pred_check
        %p229 = pneg %p102
      $region26: #{allo_loss_forward.1} parent=15 // pred_check_branch
        %231 = sbr.rel (%p229) target = $region28
      $region27: #{allo_loss_forward.1} parent=15 // pred_region
        %s232 = sadd.s32 %s19, %s20
        %s233 = smul.u32 2, %s232
        %p234 = scmp.lt.s32.totalorder %s233, 3
        %s235 = scalar_select %p234, %s233, 3
        %s236 = smul.addr %s235, 8
        %s237 = scalar_lea.vmem %s2, %s236
        %s238 = sadd.s32 %s19, %s20
        %s239 = smul.u32 2, %s238
      $region28: #{allo_loss_forward.1} parent=15 // pred_fallthru
        _
      // Predicated region
      $region29: #{allo_loss_forward.1} parent=15 // pred_check
        %p240 = pneg %p130
      $region30: #{allo_loss_forward.1} parent=15 // pred_check_branch
        %242 = sbr.rel (%p240) target = $region32
      $region31: #{allo_loss_forward.1} parent=15 // pred_region
        %s243 = sadd.s32 %s19, %s20
        %s244 = smul.u32 2, %s243
        %p245 = scmp.lt.s32.totalorder %s244, 3
        %s246 = scalar_select %p245, %s244, 3
        %s247 = smul.addr %s246, 8
        %s248 = scalar_lea.vmem %s3, %s247
        %s249 = sadd.s32 %s19, %s20
        %s250 = smul.u32 2, %s249
      $region32: #{allo_loss_forward.1} parent=15 // pred_fallthru
        _
    $region16: #{allo_loss_forward.1} parent=5 // pred_fallthru
      _
    %p251 = scmp.le.s32.totalorder 1, %s12
    %p252 = scmp.lt.s32.totalorder %s12, 3
    %p253 = pnand %p251, %p252
    %p254 = pneg %p253
    // Predicated region
    $region33: #{allo_loss_forward.1} parent=5 // pred_check
      _
    $region34: #{allo_loss_forward.1} parent=5 // pred_check_branch
      %256 = sbr.rel (%p253) target = $region36
    $region35: #{allo_loss_forward.1} parent=5 // pred_region
      %s257 = ssub.s32 %s12, 1
      %s258 = sadd.s32 %s21, %s22
      %s259 = smul.u32 2, %s258
      %p260 = scmp.lt.s32.totalorder %s259, 3
      %s261 = scalar_select %p260, %s259, 3
      %s262 = smul.addr %s261, 8
      %s263 = scalar_lea.vmem %s0, %s262
      %p264 = pneg %p52
      %p265 = pneg %p49
      %s266 = sadd.s32 %s21, %s22
      %s267 = smul.u32 2, %s266
      %p268 = scmp.lt.s32.totalorder %s267, 3
      %s269 = scalar_select %p268, %s267, 3
      %s270 = smul.addr %s269, 8
      %s271 = scalar_lea.vmem %s1, %s270
      %p272 = pneg %p80
      %p273 = pneg %p77
      %s274 = sadd.s32 %s21, %s22
      %s275 = smul.u32 2, %s274
      %p276 = scmp.lt.s32.totalorder %s275, 3
      %s277 = scalar_select %p276, %s275, 3
      %s278 = smul.addr %s277, 8
      %s279 = scalar_lea.vmem %s2, %s278
      %p280 = pneg %p108
      %p281 = pneg %p105
      %s282 = sadd.s32 %s21, %s22
      %s283 = smul.u32 2, %s282
      %p284 = scmp.lt.s32.totalorder %s283, 3
      %s285 = scalar_select %p284, %s283, 3
      %s286 = smul.addr %s285, 8
      %s287 = scalar_lea.vmem %s3, %s286
      %p288 = pneg %p136
      %p289 = pneg %p133
      %p290 = pneg %p162
      %p291 = pneg %p159
      %p292 = scmp.lt.s32.totalorder %s21, 1
      %s293 = scalar_select %p292, %s21, 1
      %s294 = scalar_lea.vmem %s4, %s293
      %p295 = pneg %p188
      %p296 = pneg %p185
      %p297 = scmp.lt.s32.totalorder %s21, 1
      %s298 = scalar_select %p297, %s21, 1
      %s299 = smul.addr %s298, 16
      %s300 = smul.addr %s299, 8
      %s301 = scalar_lea.vmem %s5, %s300
      %s302 = sadd.s32 %s21, %s22
      %s303 = smul.u32 2, %s302
      %p304 = scmp.lt.s32.totalorder %s303, 3
      %s305 = scalar_select %p304, %s303, 3
      %s306 = smul.addr %s305, 8
      %s307 = scalar_lea.vmem %s0, %s306
      %s308 = sadd.s32 %s21, %s22
      %s309 = smul.u32 2, %s308
      %s310 = sadd.s32 %s21, %s22
      %s311 = smul.u32 2, %s310
      %p312 = scmp.lt.s32.totalorder %s311, 3
      %s313 = scalar_select %p312, %s311, 3
      %s314 = smul.addr %s313, 8
      %s315 = scalar_lea.vmem %s1, %s314
      %s316 = sadd.s32 %s21, %s22
      %s317 = smul.u32 2, %s316
      %s318 = sadd.s32 %s21, %s22
      %s319 = smul.u32 2, %s318
      %p320 = scmp.lt.s32.totalorder %s319, 3
      %s321 = scalar_select %p320, %s319, 3
      %s322 = smul.addr %s321, 8
      %s323 = scalar_lea.vmem %s2, %s322
      %s324 = sadd.s32 %s21, %s22
      %s325 = smul.u32 2, %s324
      %s326 = sadd.s32 %s21, %s22
      %s327 = smul.u32 2, %s326
      %p328 = scmp.lt.s32.totalorder %s327, 3
      %s329 = scalar_select %p328, %s327, 3
      %s330 = smul.addr %s329, 8
      %s331 = scalar_lea.vmem %s3, %s330
      %s332 = sadd.s32 %s21, %s22
      %s333 = smul.u32 2, %s332
      %p334 = scmp.lt.s32.totalorder %s21, 1
      %s335 = scalar_select %p334, %s21, 1
      %s336 = scalar_lea.vmem %s4, %s335
      %p337 = scmp.lt.s32.totalorder %s21, 1
      %s338 = scalar_select %p337, %s21, 1
      %s339 = smul.addr %s338, 16
      %s340 = smul.addr %s339, 8
      %s341 = scalar_lea.vmem %s5, %s340
      %p342 = scmp.eq.s32.totalorder %s22, 0
      // Predicated region
      $region37: #{allo_loss_forward.1} parent=35 // pred_check
        %p343 = pneg %p342
      $region38: #{allo_loss_forward.1} parent=35 // pred_check_branch
        %345 = sbr.rel (%p343) target = $region40
      $region39: #{allo_loss_forward.1} parent=35 // pred_region
        %346 = vst [vmem:[%s336] sm:$0x1] 0.0
        %347 = vst [vmem:[%s341] sm:$0xff] 0.0
        %348 = vst [vmem:[%s341 + $0x8] sm:$0xff] 0.0
        %349 = vst [vmem:[%s341 + $0x10] sm:$0xff] 0.0
        %350 = vst [vmem:[%s341 + $0x18] sm:$0xff] 0.0
        %351 = vst [vmem:[%s341 + $0x20] sm:$0xff] 0.0
        %352 = vst [vmem:[%s341 + $0x28] sm:$0xff] 0.0
        %353 = vst [vmem:[%s341 + $0x30] sm:$0xff] 0.0
        %354 = vst [vmem:[%s341 + $0x38] sm:$0xff] 0.0
        %355 = vst [vmem:[%s341 + $0x40] sm:$0xff] 0.0
        %356 = vst [vmem:[%s341 + $0x48] sm:$0xff] 0.0
        %357 = vst [vmem:[%s341 + $0x50] sm:$0xff] 0.0
        %358 = vst [vmem:[%s341 + $0x58] sm:$0xff] 0.0
        %359 = vst [vmem:[%s341 + $0x60] sm:$0xff] 0.0
        %360 = vst [vmem:[%s341 + $0x68] sm:$0xff] 0.0
        %361 = vst [vmem:[%s341 + $0x70] sm:$0xff] 0.0
        %362 = vst [vmem:[%s341 + $0x78] sm:$0xff] 0.0
      $region40: #{allo_loss_forward.1} parent=35 // pred_fallthru
        _
      %v363 = vld [vmem:[%s307] sm:$0xff]
      %v364 = vld [vmem:[%s307 + $0x8] sm:$0xff]
      %v365 = vld [vmem:[%s315] sm:$0xff]
      %v366 = vld [vmem:[%s315 + $0x8] sm:$0xff]
      %v367 = vsub.f32 %v363, %v365
      %v368 = vsub.f32 %v364, %v366
      %v369 = vld [vmem:[%s336] sm:$0x1]
      %v370 = vmul.f32 %v367, %v367
      %v371 = vmul.f32 %v368, %v368
      %v372 = vadd.f32 %v370, %v371
      %v373 = vrot.slane %v372, 4
      %v374 = vadd.f32 %v372, %v373
      %v375 = vrot.slane %v374, 2
      %v376 = vadd.f32 %v374, %v375
      %v377 = vrot.slane %v376, 1
      %v378 = vadd.f32 %v376, %v377
      %v379 = vadd.f32 %v369, %v378
      %380 = vst [vmem:[%s336] sm:$0x1] %v379
      %v381 = vld [vmem:[%s323] sm:$0xff]
      %v382 = vld [vmem:[%s323 + $0x8] sm:$0xff]
      %v383 = vld [vmem:[%s331] sm:$0xff]
      %v384 = vld [vmem:[%s331 + $0x8] sm:$0xff]
      %v385 = vld [vmem:[%s341] sm:$0xff]
      %v386 = vld [vmem:[%s341 + $0x8] sm:$0xff]
      %v387 = vld [vmem:[%s341 + $0x10] sm:$0xff]
      %v388 = vld [vmem:[%s341 + $0x18] sm:$0xff]
      %v389 = vld [vmem:[%s341 + $0x20] sm:$0xff]
      %v390 = vld [vmem:[%s341 + $0x28] sm:$0xff]
      %v391 = vld [vmem:[%s341 + $0x30] sm:$0xff]
      %v392 = vld [vmem:[%s341 + $0x38] sm:$0xff]
      %v393 = vld [vmem:[%s341 + $0x40] sm:$0xff]
      %v394 = vld [vmem:[%s341 + $0x48] sm:$0xff]
      %v395 = vld [vmem:[%s341 + $0x50] sm:$0xff]
      %v396 = vld [vmem:[%s341 + $0x58] sm:$0xff]
      %v397 = vld [vmem:[%s341 + $0x60] sm:$0xff]
      %v398 = vld [vmem:[%s341 + $0x68] sm:$0xff]
      %v399 = vld [vmem:[%s341 + $0x70] sm:$0xff]
      %v400 = vld [vmem:[%s341 + $0x78] sm:$0xff]
      %401 = vxpose.xlu0.b32.start [1/16] %v383, 128
      %402 = vxpose.xlu0.b32.cont [2/16] %v384, 128
      %403 = vxpose.xlu0.b32.cont [3/16] 0.0, 128
      %404 = vxpose.xlu0.b32.cont [4/16] 0.0, 128
      %405 = vxpose.xlu0.b32.cont [5/16] 0.0, 128
      %406 = vxpose.xlu0.b32.cont [6/16] 0.0, 128
      %407 = vxpose.xlu0.b32.cont [7/16] 0.0, 128
      %408 = vxpose.xlu0.b32.cont [8/16] 0.0, 128
      %409 = vxpose.xlu0.b32.cont [9/16] 0.0, 128
      %410 = vxpose.xlu0.b32.cont [10/16] 0.0, 128
      %411 = vxpose.xlu0.b32.cont [11/16] 0.0, 128
      %412 = vxpose.xlu0.b32.cont [12/16] 0.0, 128
      %413 = vxpose.xlu0.b32.cont [13/16] 0.0, 128
      %414 = vxpose.xlu0.b32.cont [14/16] 0.0, 128
      %415 = vxpose.xlu0.b32.cont [15/16] 0.0, 128
      %416 = vxpose.xlu0.b32.end [16/16] 0.0, 128
      %v417 = vpop.trf.xlu0
      %v418 = vpop.trf.xlu0
      %v419 = vpop.trf.xlu0
      %v420 = vpop.trf.xlu0
      %v421 = vpop.trf.xlu0
      %v422 = vpop.trf.xlu0
      %v423 = vpop.trf.xlu0
      %v424 = vpop.trf.xlu0
      %v425 = vpop.trf.xlu0
      %v426 = vpop.trf.xlu0
      %v427 = vpop.trf.xlu0
      %v428 = vpop.trf.xlu0
      %v429 = vpop.trf.xlu0
      %v430 = vpop.trf.xlu0
      %v431 = vpop.trf.xlu0
      %v432 = vpop.trf.xlu0
      %vm433 = vcmask 130048
      %v435 = vsel %vm433, %v417, 0
      %v438 = vsel %vm433, %v418, 0
      %v441 = vsel %vm433, %v419, 0
      %v444 = vsel %vm433, %v420, 0
      %v447 = vsel %vm433, %v421, 0
      %v450 = vsel %vm433, %v422, 0
      %v453 = vsel %vm433, %v423, 0
      %v456 = vsel %vm433, %v424, 0
      %v459 = vsel %vm433, %v425, 0
      %v462 = vsel %vm433, %v426, 0
      %v465 = vsel %vm433, %v427, 0
      %v468 = vsel %vm433, %v428, 0
      %v471 = vsel %vm433, %v429, 0
      %v474 = vsel %vm433, %v430, 0
      %v477 = vsel %vm433, %v431, 0
      %v480 = vsel %vm433, %v432, 0
      %482 = vmatprep.subr.mxu0 0.0
      %483 = vmatpush1.msra.mxu0 %v383
      %484 = vmatprep.subr.mxu0 0.0
      %485 = vmatpush1.msra.mxu0 %v384
      %486 = vmatprep.subr.mxu0 0.0
      %487 = vmatpush1.msra.mxu0 0.0
      %488 = vmatprep.subr.mxu0 0.0
      %489 = vmatpush1.msra.mxu0 0.0
      %490 = vmatprep.subr.mxu0 0.0
      %491 = vmatpush1.msra.mxu0 0.0
      %492 = vmatprep.subr.mxu0 0.0
      %493 = vmatpush1.msra.mxu0 0.0
      %494 = vmatprep.subr.mxu0 0.0
      %495 = vmatpush1.msra.mxu0 0.0
      %496 = vmatprep.subr.mxu0 0.0
      %497 = vmatpush1.msra.mxu0 0.0
      %498 = vmatprep.subr.mxu0 0.0
      %499 = vmatpush1.msra.mxu0 0.0
      %500 = vmatprep.subr.mxu0 0.0
      %501 = vmatpush1.msra.mxu0 0.0
      %502 = vmatprep.subr.mxu0 0.0
      %503 = vmatpush1.msra.mxu0 0.0
      %504 = vmatprep.subr.mxu0 0.0
      %505 = vmatpush1.msra.mxu0 0.0
      %506 = vmatprep.subr.mxu0 0.0
      %507 = vmatpush1.msra.mxu0 0.0
      %508 = vmatprep.subr.mxu0 0.0
      %509 = vmatpush1.msra.mxu0 0.0
      %510 = vmatprep.subr.mxu0 0.0
      %511 = vmatpush1.msra.mxu0 0.0
      %512 = vmatprep.subr.mxu0 0.0
      %513 = vmatpush1.msra.mxu0 0.0
      %514 = vmatprep.subr.mxu0 0.0
      %515 = vmatpush1.msra.mxu0 0.0
      %516 = vmatprep.subr.mxu0 0.0
      %517 = vmatpush1.msra.mxu0 0.0
      %518 = vmatprep.subr.mxu0 0.0
      %519 = vmatpush1.msra.mxu0 0.0
      %520 = vmatprep.subr.mxu0 0.0
      %521 = vmatpush1.msra.mxu0 0.0
      %522 = vmatprep.subr.mxu0 0.0
      %523 = vmatpush1.msra.mxu0 0.0
      %524 = vmatprep.subr.mxu0 0.0
      %525 = vmatpush1.msra.mxu0 0.0
      %526 = vmatprep.subr.mxu0 0.0
      %527 = vmatpush1.msra.mxu0 0.0
      %528 = vmatprep.subr.mxu0 0.0
      %529 = vmatpush1.msra.mxu0 0.0
      %530 = vmatprep.subr.mxu0 0.0
      %531 = vmatpush1.msra.mxu0 0.0
      %532 = vmatprep.subr.mxu0 0.0
      %533 = vmatpush1.msra.mxu0 0.0
      %534 = vmatprep.subr.mxu0 0.0
      %535 = vmatpush1.msra.mxu0 0.0
      %536 = vmatprep.subr.mxu0 0.0
      %537 = vmatpush1.msra.mxu0 0.0
      %538 = vmatprep.subr.mxu0 0.0
      %539 = vmatpush1.msra.mxu0 0.0
      %540 = vmatprep.subr.mxu0 0.0
      %541 = vmatpush1.msra.mxu0 0.0
      %542 = vmatprep.subr.mxu0 0.0
      %543 = vmatpush1.msra.mxu0 0.0
      %544 = vmatprep.subr.mxu0 0.0
      %545 = vmatpush1.msra.mxu0 0.0
      %546 = vmatprep.mubr.f32.mxu0 0.0
      %547 = vmatmul.mubr.f32.gmra.mrb[0].mxu0 %v435
      %v548 = vpop.f32.mrb[0].mxu0
      %v549 = vadd.f32 0.0, %v548
      %v550 = vpop.f32.mrb[0].mxu0
      %551 = vmatprep.mubr.f32.mxu0 0.0
      %552 = vmatmul.mubr.f32.gmra.mrb[0].mxu0 %v438
      %v553 = vpop.f32.mrb[0].mxu0
      %v554 = vadd.f32 0.0, %v553
      %v555 = vpop.f32.mrb[0].mxu0
      %556 = vmatprep.mubr.f32.mxu0 0.0
      %557 = vmatmul.mubr.f32.gmra.mrb[0].mxu0 %v441
      %v558 = vpop.f32.mrb[0].mxu0
      %v559 = vadd.f32 0.0, %v558
      %v560 = vpop.f32.mrb[0].mxu0
      %561 = vmatprep.mubr.f32.mxu0 0.0
      %562 = vmatmul.mubr.f32.gmra.mrb[0].mxu0 %v444
      %v563 = vpop.f32.mrb[0].mxu0
      %v564 = vadd.f32 0.0, %v563
      %v565 = vpop.f32.mrb[0].mxu0
      %566 = vmatprep.mubr.f32.mxu0 0.0
      %567 = vmatmul.mubr.f32.gmra.mrb[0].mxu0 %v447
      %v568 = vpop.f32.mrb[0].mxu0
      %v569 = vadd.f32 0.0, %v568
      %v570 = vpop.f32.mrb[0].mxu0
      %571 = vmatprep.mubr.f32.mxu0 0.0
      %572 = vmatmul.mubr.f32.gmra.mrb[0].mxu0 %v450
      %v573 = vpop.f32.mrb[0].mxu0
      %v574 = vadd.f32 0.0, %v573
      %v575 = vpop.f32.mrb[0].mxu0
      %576 = vmatprep.mubr.f32.mxu0 0.0
      %577 = vmatmul.mubr.f32.gmra.mrb[0].mxu0 %v453
      %v578 = vpop.f32.mrb[0].mxu0
      %v579 = vadd.f32 0.0, %v578
      %v580 = vpop.f32.mrb[0].mxu0
      %581 = vmatprep.mubr.f32.mxu0 0.0
      %582 = vmatmul.mubr.f32.gmra.mrb[0].mxu0 %v456
      %v583 = vpop.f32.mrb[0].mxu0
      %v584 = vadd.f32 0.0, %v583
      %v585 = vpop.f32.mrb[0].mxu0
      %586 = vmatprep.mubr.f32.mxu0 0.0
      %587 = vmatmul.mubr.f32.gmra.mrb[0].mxu0 %v459
      %v588 = vpop.f32.mrb[0].mxu0
      %v589 = vadd.f32 0.0, %v588
      %v590 = vpop.f32.mrb[0].mxu0
      %591 = vmatprep.mubr.f32.mxu0 0.0
      %592 = vmatmul.mubr.f32.gmra.mrb[0].mxu0 %v462
      %v593 = vpop.f32.mrb[0].mxu0
      %v594 = vadd.f32 0.0, %v593
      %v595 = vpop.f32.mrb[0].mxu0
      %596 = vmatprep.mubr.f32.mxu0 0.0
      %597 = vmatmul.mubr.f32.gmra.mrb[0].mxu0 %v465
      %v598 = vpop.f32.mrb[0].mxu0
      %v599 = vadd.f32 0.0, %v598
      %v600 = vpop.f32.mrb[0].mxu0
      %601 = vmatprep.mubr.f32.mxu0 0.0
      %602 = vmatmul.mubr.f32.gmra.mrb[0].mxu0 %v468
      %v603 = vpop.f32.mrb[0].mxu0
      %v604 = vadd.f32 0.0, %v603
      %v605 = vpop.f32.mrb[0].mxu0
      %606 = vmatprep.mubr.f32.mxu0 0.0
      %607 = vmatmul.mubr.f32.gmra.mrb[0].mxu0 %v471
      %v608 = vpop.f32.mrb[0].mxu0
      %v609 = vadd.f32 0.0, %v608
      %v610 = vpop.f32.mrb[0].mxu0
      %611 = vmatprep.mubr.f32.mxu0 0.0
      %612 = vmatmul.mubr.f32.gmra.mrb[0].mxu0 %v474
      %v613 = vpop.f32.mrb[0].mxu0
      %v614 = vadd.f32 0.0, %v613
      %v615 = vpop.f32.mrb[0].mxu0
      %616 = vmatprep.mubr.f32.mxu0 0.0
      %617 = vmatmul.mubr.f32.gmra.mrb[0].mxu0 %v477
      %v618 = vpop.f32.mrb[0].mxu0
      %v619 = vadd.f32 0.0, %v618
      %v620 = vpop.f32.mrb[0].mxu0
      %621 = vmatprep.mubr.f32.mxu0 0.0
      %622 = vmatmul.mubr.f32.gmra.mrb[0].mxu0 %v480
      %v623 = vpop.f32.mrb[0].mxu0
      %v624 = vadd.f32 0.0, %v623
      %v625 = vpop.f32.mrb[0].mxu0
      %626 = vdwg.mxu0
      %627 = vxpose.xlu0.b32.start [1/16] %v381, 128
      %628 = vxpose.xlu0.b32.cont [2/16] %v382, 128
      %629 = vxpose.xlu0.b32.cont [3/16] 0.0, 128
      %630 = vxpose.xlu0.b32.cont [4/16] 0.0, 128
      %631 = vxpose.xlu0.b32.cont [5/16] 0.0, 128
      %632 = vxpose.xlu0.b32.cont [6/16] 0.0, 128
      %633 = vxpose.xlu0.b32.cont [7/16] 0.0, 128
      %634 = vxpose.xlu0.b32.cont [8/16] 0.0, 128
      %635 = vxpose.xlu0.b32.cont [9/16] 0.0, 128
      %636 = vxpose.xlu0.b32.cont [10/16] 0.0, 128
      %637 = vxpose.xlu0.b32.cont [11/16] 0.0, 128
      %638 = vxpose.xlu0.b32.cont [12/16] 0.0, 128
      %639 = vxpose.xlu0.b32.cont [13/16] 0.0, 128
      %640 = vxpose.xlu0.b32.cont [14/16] 0.0, 128
      %641 = vxpose.xlu0.b32.cont [15/16] 0.0, 128
      %642 = vxpose.xlu0.b32.end [16/16] 0.0, 128
      %v643 = vpop.trf.xlu0
      %v644 = vpop.trf.xlu0
      %v645 = vpop.trf.xlu0
      %v646 = vpop.trf.xlu0
      %v647 = vpop.trf.xlu0
      %v648 = vpop.trf.xlu0
      %v649 = vpop.trf.xlu0
      %v650 = vpop.trf.xlu0
      %v651 = vpop.trf.xlu0
      %v652 = vpop.trf.xlu0
      %v653 = vpop.trf.xlu0
      %v654 = vpop.trf.xlu0
      %v655 = vpop.trf.xlu0
      %v656 = vpop.trf.xlu0
      %v657 = vpop.trf.xlu0
      %v658 = vpop.trf.xlu0
      %v660 = vsel %vm433, %v643, 0
      %v663 = vsel %vm433, %v644, 0
      %v666 = vsel %vm433, %v645, 0
      %v669 = vsel %vm433, %v646, 0
      %v672 = vsel %vm433, %v647, 0
      %v675 = vsel %vm433, %v648, 0
      %v678 = vsel %vm433, %v649, 0
      %v681 = vsel %vm433, %v650, 0
      %v684 = vsel %vm433, %v651, 0
      %v687 = vsel %vm433, %v652, 0
      %v690 = vsel %vm433, %v653, 0
      %v693 = vsel %vm433, %v654, 0
      %v696 = vsel %vm433, %v655, 0
      %v699 = vsel %vm433, %v656, 0
      %v702 = vsel %vm433, %v657, 0
      %v705 = vsel %vm433, %v658, 0
      %707 = vmatprep.subr.mxu0 0.0
      %708 = vmatpush1.msra.mxu0 %v381
      %709 = vmatprep.subr.mxu0 0.0
      %710 = vmatpush1.msra.mxu0 %v382
      %711 = vmatprep.subr.mxu0 0.0
      %712 = vmatpush1.msra.mxu0 0.0
      %713 = vmatprep.subr.mxu0 0.0
      %714 = vmatpush1.msra.mxu0 0.0
      %715 = vmatprep.subr.mxu0 0.0
      %716 = vmatpush1.msra.mxu0 0.0
      %717 = vmatprep.subr.mxu0 0.0
      %718 = vmatpush1.msra.mxu0 0.0
      %719 = vmatprep.subr.mxu0 0.0
      %720 = vmatpush1.msra.mxu0 0.0
      %721 = vmatprep.subr.mxu0 0.0
      %722 = vmatpush1.msra.mxu0 0.0
      %723 = vmatprep.subr.mxu0 0.0
      %724 = vmatpush1.msra.mxu0 0.0
      %725 = vmatprep.subr.mxu0 0.0
      %726 = vmatpush1.msra.mxu0 0.0
      %727 = vmatprep.subr.mxu0 0.0
      %728 = vmatpush1.msra.mxu0 0.0
      %729 = vmatprep.subr.mxu0 0.0
      %730 = vmatpush1.msra.mxu0 0.0
      %731 = vmatprep.subr.mxu0 0.0
      %732 = vmatpush1.msra.mxu0 0.0
      %733 = vmatprep.subr.mxu0 0.0
      %734 = vmatpush1.msra.mxu0 0.0
      %735 = vmatprep.subr.mxu0 0.0
      %736 = vmatpush1.msra.mxu0 0.0
      %737 = vmatprep.subr.mxu0 0.0
      %738 = vmatpush1.msra.mxu0 0.0
      %739 = vmatprep.subr.mxu0 0.0
      %740 = vmatpush1.msra.mxu0 0.0
      %741 = vmatprep.subr.mxu0 0.0
      %742 = vmatpush1.msra.mxu0 0.0
      %743 = vmatprep.subr.mxu0 0.0
      %744 = vmatpush1.msra.mxu0 0.0
      %745 = vmatprep.subr.mxu0 0.0
      %746 = vmatpush1.msra.mxu0 0.0
      %747 = vmatprep.subr.mxu0 0.0
      %748 = vmatpush1.msra.mxu0 0.0
      %749 = vmatprep.subr.mxu0 0.0
      %750 = vmatpush1.msra.mxu0 0.0
      %751 = vmatprep.subr.mxu0 0.0
      %752 = vmatpush1.msra.mxu0 0.0
      %753 = vmatprep.subr.mxu0 0.0
      %754 = vmatpush1.msra.mxu0 0.0
      %755 = vmatprep.subr.mxu0 0.0
      %756 = vmatpush1.msra.mxu0 0.0
      %757 = vmatprep.subr.mxu0 0.0
      %758 = vmatpush1.msra.mxu0 0.0
      %759 = vmatprep.subr.mxu0 0.0
      %760 = vmatpush1.msra.mxu0 0.0
      %761 = vmatprep.subr.mxu0 0.0
      %762 = vmatpush1.msra.mxu0 0.0
      %763 = vmatprep.subr.mxu0 0.0
      %764 = vmatpush1.msra.mxu0 0.0
      %765 = vmatprep.subr.mxu0 0.0
      %766 = vmatpush1.msra.mxu0 0.0
      %767 = vmatprep.subr.mxu0 0.0
      %768 = vmatpush1.msra.mxu0 0.0
      %769 = vmatprep.subr.mxu0 0.0
      %770 = vmatpush1.msra.mxu0 0.0
      %771 = vmatprep.mubr.f32.mxu0 0.0
      %772 = vmatmul.mubr.f32.gmra.mrb[0].mxu0 %v660
      %v773 = vpop.f32.mrb[0].mxu0
      %v774 = vadd.f32 %v549, %v773
      %v775 = vpop.f32.mrb[0].mxu0
      %776 = vmatprep.mubr.f32.mxu0 0.0
      %777 = vmatmul.mubr.f32.gmra.mrb[0].mxu0 %v663
      %v778 = vpop.f32.mrb[0].mxu0
      %v779 = vadd.f32 %v554, %v778
      %v780 = vpop.f32.mrb[0].mxu0
      %781 = vmatprep.mubr.f32.mxu0 0.0
      %782 = vmatmul.mubr.f32.gmra.mrb[0].mxu0 %v666
      %v783 = vpop.f32.mrb[0].mxu0
      %v784 = vadd.f32 %v559, %v783
      %v785 = vpop.f32.mrb[0].mxu0
      %786 = vmatprep.mubr.f32.mxu0 0.0
      %787 = vmatmul.mubr.f32.gmra.mrb[0].mxu0 %v669
      %v788 = vpop.f32.mrb[0].mxu0
      %v789 = vadd.f32 %v564, %v788
      %v790 = vpop.f32.mrb[0].mxu0
      %791 = vmatprep.mubr.f32.mxu0 0.0
      %792 = vmatmul.mubr.f32.gmra.mrb[0].mxu0 %v672
      %v793 = vpop.f32.mrb[0].mxu0
      %v794 = vadd.f32 %v569, %v793
      %v795 = vpop.f32.mrb[0].mxu0
      %796 = vmatprep.mubr.f32.mxu0 0.0
      %797 = vmatmul.mubr.f32.gmra.mrb[0].mxu0 %v675
      %v798 = vpop.f32.mrb[0].mxu0
      %v799 = vadd.f32 %v574, %v798
      %v800 = vpop.f32.mrb[0].mxu0
      %801 = vmatprep.mubr.f32.mxu0 0.0
      %802 = vmatmul.mubr.f32.gmra.mrb[0].mxu0 %v678
      %v803 = vpop.f32.mrb[0].mxu0
      %v804 = vadd.f32 %v579, %v803
      %v805 = vpop.f32.mrb[0].mxu0
      %806 = vmatprep.mubr.f32.mxu0 0.0
      %807 = vmatmul.mubr.f32.gmra.mrb[0].mxu0 %v681
      %v808 = vpop.f32.mrb[0].mxu0
      %v809 = vadd.f32 %v584, %v808
      %v810 = vpop.f32.mrb[0].mxu0
      %811 = vmatprep.mubr.f32.mxu0 0.0
      %812 = vmatmul.mubr.f32.gmra.mrb[0].mxu0 %v684
      %v813 = vpop.f32.mrb[0].mxu0
      %v814 = vadd.f32 %v589, %v813
      %v815 = vpop.f32.mrb[0].mxu0
      %816 = vmatprep.mubr.f32.mxu0 0.0
      %817 = vmatmul.mubr.f32.gmra.mrb[0].mxu0 %v687
      %v818 = vpop.f32.mrb[0].mxu0
      %v819 = vadd.f32 %v594, %v818
      %v820 = vpop.f32.mrb[0].mxu0
      %821 = vmatprep.mubr.f32.mxu0 0.0
      %822 = vmatmul.mubr.f32.gmra.mrb[0].mxu0 %v690
      %v823 = vpop.f32.mrb[0].mxu0
      %v824 = vadd.f32 %v599, %v823
      %v825 = vpop.f32.mrb[0].mxu0
      %826 = vmatprep.mubr.f32.mxu0 0.0
      %827 = vmatmul.mubr.f32.gmra.mrb[0].mxu0 %v693
      %v828 = vpop.f32.mrb[0].mxu0
      %v829 = vadd.f32 %v604, %v828
      %v830 = vpop.f32.mrb[0].mxu0
      %831 = vmatprep.mubr.f32.mxu0 0.0
      %832 = vmatmul.mubr.f32.gmra.mrb[0].mxu0 %v696
      %v833 = vpop.f32.mrb[0].mxu0
      %v834 = vadd.f32 %v609, %v833
      %v835 = vpop.f32.mrb[0].mxu0
      %836 = vmatprep.mubr.f32.mxu0 0.0
      %837 = vmatmul.mubr.f32.gmra.mrb[0].mxu0 %v699
      %v838 = vpop.f32.mrb[0].mxu0
      %v839 = vadd.f32 %v614, %v838
      %v840 = vpop.f32.mrb[0].mxu0
      %841 = vmatprep.mubr.f32.mxu0 0.0
      %842 = vmatmul.mubr.f32.gmra.mrb[0].mxu0 %v702
      %v843 = vpop.f32.mrb[0].mxu0
      %v844 = vadd.f32 %v619, %v843
      %v845 = vpop.f32.mrb[0].mxu0
      %846 = vmatprep.mubr.f32.mxu0 0.0
      %847 = vmatmul.mubr.f32.gmra.mrb[0].mxu0 %v705
      %v848 = vpop.f32.mrb[0].mxu0
      %v849 = vadd.f32 %v624, %v848
      %v850 = vpop.f32.mrb[0].mxu0
      %851 = vdwg.mxu0
      %v852 = vadd.f32 %v385, %v774
      %v853 = vadd.f32 %v386, %v779
      %v854 = vadd.f32 %v387, %v784
      %v855 = vadd.f32 %v388, %v789
      %v856 = vadd.f32 %v389, %v794
      %v857 = vadd.f32 %v390, %v799
      %v858 = vadd.f32 %v391, %v804
      %v859 = vadd.f32 %v392, %v809
      %v860 = vadd.f32 %v393, %v814
      %v861 = vadd.f32 %v394, %v819
      %v862 = vadd.f32 %v395, %v824
      %v863 = vadd.f32 %v396, %v829
      %v864 = vadd.f32 %v397, %v834
      %v865 = vadd.f32 %v398, %v839
      %v866 = vadd.f32 %v399, %v844
      %v867 = vadd.f32 %v400, %v849
      %868 = vst [vmem:[%s341] sm:$0xff] %v852
      %869 = vst [vmem:[%s341 + $0x8] sm:$0xff] %v853
      %870 = vst [vmem:[%s341 + $0x10] sm:$0xff] %v854
      %871 = vst [vmem:[%s341 + $0x18] sm:$0xff] %v855
      %872 = vst [vmem:[%s341 + $0x20] sm:$0xff] %v856
      %873 = vst [vmem:[%s341 + $0x28] sm:$0xff] %v857
      %874 = vst [vmem:[%s341 + $0x30] sm:$0xff] %v858
      %875 = vst [vmem:[%s341 + $0x38] sm:$0xff] %v859
      %876 = vst [vmem:[%s341 + $0x40] sm:$0xff] %v860
      %877 = vst [vmem:[%s341 + $0x48] sm:$0xff] %v861
      %878 = vst [vmem:[%s341 + $0x50] sm:$0xff] %v862
      %879 = vst [vmem:[%s341 + $0x58] sm:$0xff] %v863
      %880 = vst [vmem:[%s341 + $0x60] sm:$0xff] %v864
      %881 = vst [vmem:[%s341 + $0x68] sm:$0xff] %v865
      %882 = vst [vmem:[%s341 + $0x70] sm:$0xff] %v866
      %883 = vst [vmem:[%s341 + $0x78] sm:$0xff] %v867
      %p884 = scmp.lt.s32.totalorder %s21, 1
      %s885 = scalar_select %p884, %s21, 1
      %s886 = scalar_lea.vmem %s4, %s885
      %p887 = scmp.lt.s32.totalorder %s21, 1
      %s888 = scalar_select %p887, %s21, 1
      %s889 = smul.addr %s888, 16
      %s890 = smul.addr %s889, 8
      %s891 = scalar_lea.vmem %s5, %s890
      // Predicated region
      $region41: #{allo_loss_forward.1} parent=35 // pred_check
        %p892 = pneg %p159
      $region42: #{allo_loss_forward.1} parent=35 // pred_check_branch
        %894 = sbr.rel (%p892) target = $region44
      $region43: #{allo_loss_forward.1} parent=35 // pred_region
        _
      $region44: #{allo_loss_forward.1} parent=35 // pred_fallthru
        _
      // Predicated region
      $region45: #{allo_loss_forward.1} parent=35 // pred_check
        %p895 = pneg %p185
      $region46: #{allo_loss_forward.1} parent=35 // pred_check_branch
        %897 = sbr.rel (%p895) target = $region48
      $region47: #{allo_loss_forward.1} parent=35 // pred_region
        _
      $region48: #{allo_loss_forward.1} parent=35 // pred_fallthru
        _
    $region36: #{allo_loss_forward.1} parent=5 // pred_fallthru
      _
    %p898 = scmp.le.s32.totalorder 2, %s12
    // Predicated region
    $region49: #{allo_loss_forward.1} parent=5 // pred_check
      %p899 = pneg %p898
    $region50: #{allo_loss_forward.1} parent=5 // pred_check_branch
      %901 = sbr.rel (%p899) target = $region52
    $region51: #{allo_loss_forward.1} parent=5 // pred_region
      %s902 = ssub.s32 %s12, 2
      // Predicated region
      $region53: #{allo_loss_forward.1} parent=51 // pred_check
        %p903 = pneg %p165
      $region54: #{allo_loss_forward.1} parent=51 // pred_check_branch
        %905 = sbr.rel (%p903) target = $region56
      $region55: #{allo_loss_forward.1} parent=51 // pred_region
        %p906 = scmp.lt.s32.totalorder %s23, 1
        %s907 = scalar_select %p906, %s23, 1
        %s908 = scalar_lea.vmem %s4, %s907
      $region56: #{allo_loss_forward.1} parent=51 // pred_fallthru
        _
      // Predicated region
      $region57: #{allo_loss_forward.1} parent=51 // pred_check
        %p909 = pneg %p191
      $region58: #{allo_loss_forward.1} parent=51 // pred_check_branch
        %911 = sbr.rel (%p909) target = $region60
      $region59: #{allo_loss_forward.1} parent=51 // pred_region
        %p912 = scmp.lt.s32.totalorder %s23, 1
        %s913 = scalar_select %p912, %s23, 1
        %s914 = smul.addr %s913, 16
        %s915 = smul.addr %s914, 8
        %s916 = scalar_lea.vmem %s5, %s915
      $region60: #{allo_loss_forward.1} parent=51 // pred_fallthru
        _
    $region52: #{allo_loss_forward.1} parent=5 // pred_fallthru
      _
  $region6: #{allo_loss_forward.1} parent=0 // loop_footer
    %s16 = sadd.s32 1, %s12
  $region7: #{allo_loss_forward.1} parent=0 // loop_footer_branch
    %11 = sbr.rel target = $region3
  $region8: #{allo_loss_forward.1} parent=0 // loop_exit
    _

</llo_original>
